<compile_context>
chip_gen: v5e
topology: v5e:2x2
jax: 0.10.0
libtpu: 0.0.40
codegen_flags: <defaults>
</compile_context>

<pallas_src>
import math
import functools

import jax
import jax.numpy as jnp
from jax.experimental import pallas as pl
from jax.experimental.pallas import tpu as pltpu


def _round_up(x: int, m: int) -> int:
    return ((x + m - 1) // m) * m


@functools.lru_cache(maxsize=None)
def _vmem_caps():
    """Generation-aware tile/VMEM budgets (conservative default is v7x-safe)."""
    vmem = None
    try:
        info = pltpu.get_tpu_info()
        vmem = getattr(info, "vmem_capacity_bytes", None)
    except Exception:
        vmem = None
    if vmem is not None and vmem > (64 << 20):
        # 128-MiB VMEM parts (v5e / v6e): bigger tiles, fewer grid steps.
        return {"budget": 48 << 20, "tn_cap": 4096, "tile_m_cap": 2048,
                "vmem_limit": 96 << 20, "w_resident_cap": 16 << 20}
    # v7x (64 MiB physical / 32 MiB scoped VMEM per TensorCore) and unknown.
    return {"budget": 24 << 20, "tn_cap": 2048, "tile_m_cap": 1024,
            "vmem_limit": 40 << 20, "w_resident_cap": 8 << 20}


def _fourier_kernel(x_ref, w_ref, o_ref):
    # x_ref: (TM, K)  VMEM   rows of (lane-folded) input, last column == 1
    # w_ref: (K, TN)  VMEM   selection * frequency matrix, last row == phase
    # o_ref: (TM, TN) VMEM
    # Each W column has exactly one frequency entry plus the phase entry, so
    # with precision=HIGHEST the contraction reproduces x_i*f_k + phase in f32.
    z = jnp.dot(x_ref[...], w_ref[...],
                precision=jax.lax.Precision.HIGHEST,
                preferred_element_type=jnp.float32)
    o_ref[...] = jnp.sin(z).astype(o_ref.dtype)


def _build_w_with_phase(fan_in: int, n_fourier_features: int, freq_spacing_type: str):
    """(fan_in+1, 2*fan_in*F) matrix: sparse selection*freq rows + phase row."""
    F = n_fourier_features
    if freq_spacing_type == "logarithmic":
        freqs = math.pi * (2.0 ** jnp.arange(0, F, dtype=jnp.float32))
    elif freq_spacing_type == "linear":
        freqs = math.pi * jnp.arange(1, F + 1, dtype=jnp.float32)
    else:
        raise ValueError(f"Unknown frequency spacing type: {freq_spacing_type}")

    out_dim = 2 * fan_in * F
    j = jnp.arange(out_dim)
    feat_idx = j // (2 * F)                 # which input feature this column reads
    freq_idx = (j % (2 * F)) // 2           # which frequency
    is_cos = (j % 2).astype(jnp.float32)    # 0 -> sin slot, 1 -> cos slot

    sel = (feat_idx[None, :] == jnp.arange(fan_in)[:, None]).astype(jnp.float32)
    w = sel * freqs[freq_idx][None, :]                  # (fan_in, out_dim)
    phase = (is_cos * (math.pi / 2.0))[None, :]         # (1, out_dim)  sin/cos phase
    return jnp.concatenate([w, phase], axis=0)          # (fan_in+1, out_dim)


def _choose_fold(out_dim: int, fan_in: int, w_cap_bytes: int) -> int:
    """Row-fold factor g so the folded output width g*out_dim is 128-lane dense."""
    if out_dim % 128 == 0:
        return 1
    g = 128 // math.gcd(out_dim, 128)       # smallest g with (g*out_dim) % 128 == 0
    if (g * fan_in + 1) * (g * out_dim) * 4 > w_cap_bytes:
        return 1                            # keep the dense folded W VMEM-resident
    return g


@functools.partial(jax.jit,
                   static_argnames=("n_fourier_features", "freq_spacing_type", "out_dtype"))
def fourier_layer(x, *, n_fourier_features: int, freq_spacing_type: str = "logarithmic",
                  out_dtype=jnp.float32):
    """x: (..., fan_in) -> (..., 2*fan_in*n_fourier_features) in `out_dtype`."""
    fan_in = x.shape[-1]
    F = int(n_fourier_features)
    out_dim = 2 * fan_in * F
    lead = x.shape[:-1]
    m = math.prod(lead) if lead else 1

    caps = _vmem_caps()
    BYTES = 4

    x2 = x.reshape(m, fan_in).astype(jnp.float32)

    # ---- Lane-dense row folding (pad M so the fold is always exact). ----
    g = _choose_fold(out_dim, fan_in, caps["w_resident_cap"])
    m_pad = _round_up(m, g) if g > 1 else m
    if m_pad != m:
        x2 = jnp.pad(x2, ((0, m_pad - m), (0, 0)))      # zero rows, sliced off later
    m_eff = m_pad // g
    fan_in_eff = g * fan_in
    out_dim_eff = g * out_dim
    if g > 1:
        x2 = x2.reshape(m_eff, fan_in_eff)               # free row-major reshape

    # ---- Fold the phase add into the matmul (ones column + phase row). ----
    w = _build_w_with_phase(fan_in_eff, F, freq_spacing_type)     # (K, out_dim_eff)
    K = fan_in_eff + 1
    x2 = jnp.concatenate([x2, jnp.ones((m_eff, 1), jnp.float32)], axis=1)

    w_bytes = K * out_dim_eff * BYTES
    w_resident = w_bytes <= caps["w_resident_cap"]

    # ---- Column tile / W residency. ----
    if w_resident:
        tn = out_dim_eff                                  # single column tile, W fetched once
    else:
        if out_dim_eff % 128 == 0:
            tn = min(out_dim_eff, caps["tn_cap"])
            while tn % 256 == 0 and 2 * BYTES * K * tn > caps["budget"] // 4:
                tn //= 2                                  # keep double-buffered W tile modest
        else:
            tn = out_dim_eff
    grid_cols = pl.cdiv(out_dim_eff, tn)

    # ---- Row tile from the VMEM working-set budget. ----
    fixed = 2 * (w_bytes if w_resident else BYTES * K * tn)       # W (double-buffer counted)
    per_row = 2 * BYTES * (K + 2 * tn)                            # x + out (x2) + f32 z scratch
    tile_m = max(8, min(caps["tile_m_cap"], (caps["budget"] - fixed) // per_row))
    tile_m = max(8, (tile_m // 8) * 8)                            # sublane (8) alignment
    tile_m = min(tile_m, max(8, _round_up(m_eff, 8)))
    grid_rows = pl.cdiv(m_eff, tile_m)

    # v7x megacore: keep the row-tile count even (and >= 2) when small so both
    # TensorCores get balanced work; ~one extra 0.35us grid step on 1-TC chips.
    if m_eff >= 16:
        target = None
        if grid_rows == 1:
            target = 2
        elif grid_rows <= 8 and grid_rows % 2 == 1:
            target = grid_rows + 1
        if target is not None:
            tile_m = max(8, _round_up(pl.cdiv(m_eff, target), 8))
            grid_rows = pl.cdiv(m_eff, tile_m)

    # ---- Grid / specs. ----
    if w_resident:
        grid = (grid_rows,)
        in_specs = [pl.BlockSpec((tile_m, K), lambda i: (i, 0)),
                    pl.BlockSpec((K, out_dim_eff), lambda i: (0, 0))]   # constant -> resident
        out_specs = pl.BlockSpec((tile_m, out_dim_eff), lambda i: (i, 0))
        dims = ("parallel",)
    else:
        # Column axis is the slow grid axis so each W column tile is fetched once.
        grid = (grid_cols, grid_rows)
        in_specs = [pl.BlockSpec((tile_m, K), lambda j, i: (i, 0)),
                    pl.BlockSpec((K, tn), lambda j, i: (0, j))]
        out_specs = pl.BlockSpec((tile_m, tn), lambda j, i: (i, j))
        dims = ("parallel", "parallel")

    cost = pl.CostEstimate(
        flops=2 * m_eff * K * out_dim_eff,
        transcendentals=m_eff * out_dim_eff,
        bytes_accessed=BYTES * (m_eff * K + K * out_dim_eff)
                       + m_eff * out_dim_eff * jnp.dtype(out_dtype).itemsize,
    )

    out = pl.pallas_call(
        _fourier_kernel,
        out_shape=jax.ShapeDtypeStruct((m_eff, out_dim_eff), jnp.dtype(out_dtype)),
        grid_spec=pltpu.PrefetchScalarGridSpec(
            num_scalar_prefetch=0,
            grid=grid,
            in_specs=in_specs,
            out_specs=out_specs,
        ),
        compiler_params=pltpu.CompilerParams(
            dimension_semantics=dims,
            vmem_limit_bytes=caps["vmem_limit"],
        ),
        cost_estimate=cost,
    )(x2, w)

    out = out.reshape(m_pad, out_dim)
    if m_pad != m:
        out = out[:m]
    return out.reshape(lead + (out_dim,))


def _fourier_layer_ref(x, n_fourier_features, freq_spacing_type="logarithmic"):
    """Pure-JAX reference mirroring the PyTorch forward_fn exactly."""
    F = n_fourier_features
    xe = x[..., None].astype(jnp.float32)
    if freq_spacing_type == "logarithmic":
        feature_mul = math.pi * (2.0 ** jnp.arange(0, F, dtype=jnp.float32))
    else:
        feature_mul = math.pi * jnp.arange(1, F + 1, dtype=jnp.float32)
    s = jnp.sin(xe * feature_mul)
    c = jnp.cos(xe * feature_mul)
    out = jnp.concatenate([s[..., None], c[..., None]], axis=-1)
    return out.reshape(x.shape[:-1] + (x.shape[-1] * F * 2,))


# TODO(synk): the PyTorch no_grad/requires_grad guard is autograd bookkeeping with no
# Pallas equivalent; the JAX forward is already gradient-free unless differentiated.

if __name__ == "__main__":
    key = jax.random.PRNGKey(0)
    k1, k2, k3 = jax.random.split(key, 3)

    # Test 1: small shape, logarithmic spacing (lane-dense row folding, out_dim=32 -> 128 lanes).
    batch, seq, fan_in = 2, 8, 4
    F1 = 4
    x1 = jax.random.normal(k1, (batch, seq, fan_in), dtype=jnp.float32)
    out1 = jax.block_until_ready(
        fourier_layer(x1, n_fourier_features=F1, freq_spacing_type="logarithmic"))
    ref1 = _fourier_layer_ref(x1, F1, "logarithmic")
    assert out1.shape == (batch, seq, 2 * fan_in * F1), out1.shape
    assert jnp.allclose(out1, ref1, atol=1e-5, rtol=1e-5), float(jnp.max(jnp.abs(out1 - ref1)))

    # Test 2: linear spacing, out_dim = 128 (no folding), multiple (even) row-grid steps.
    x2 = jax.random.normal(k2, (4, 128, 8), dtype=jnp.float32)
    F2 = 8
    out2 = jax.block_until_ready(
        fourier_layer(x2, n_fourier_features=F2, freq_spacing_type="linear"))
    ref2 = _fourier_layer_ref(x2, F2, "linear")
    assert out2.shape == (4, 128, 2 * 8 * F2), out2.shape
    assert jnp.allclose(out2, ref2, atol=1e-4, rtol=1e-4), float(jnp.max(jnp.abs(out2 - ref2)))

    # Test 3: fold with row padding (m = 15 not divisible by g = 4).
    x3 = jax.random.normal(k3, (3, 5, 4), dtype=jnp.float32)
    out3 = jax.block_until_ready(
        fourier_layer(x3, n_fourier_features=4, freq_spacing_type="logarithmic"))
    ref3 = _fourier_layer_ref(x3, 4, "logarithmic")
    assert out3.shape == (3, 5, 32), out3.shape
    assert jnp.allclose(out3, ref3, atol=1e-5, rtol=1e-5), float(jnp.max(jnp.abs(out3 - ref3)))

    # Test 4: bf16 output path (halves HBM writeback for bandwidth-bound parts).
    out4 = jax.block_until_ready(
        fourier_layer(x2, n_fourier_features=F2, freq_spacing_type="linear",
                      out_dtype=jnp.bfloat16))
    assert out4.dtype == jnp.bfloat16
    assert jnp.allclose(out4.astype(jnp.float32), ref2, atol=1.5e-2, rtol=1.5e-2), \
        float(jnp.max(jnp.abs(out4.astype(jnp.float32) - ref2)))

    print("KERNEL_OK")
</pallas_src>

<mosaic_0001>
module attributes {stable_mosaic.version = 11 : i64} {
  func.func @_fourier_kernel(%arg0: i32, %arg1: memref<8x17xf32, #tpu.memory_space<vmem>>, %arg2: memref<17x128xf32, #tpu.memory_space<vmem>>, %arg3: memref<8x128xf32, #tpu.memory_space<vmem>>) attributes {dimension_semantics = [#tpu.dimension_semantics<parallel>], iteration_bounds = array<i64: 1>, scalar_prefetch = 0 : i64, scratch_operands = 0 : i64, tpu.core_type = #tpu.core_type<tc>, window_params = [{transform_indices = @transform_0, window_bounds = array<i64: 8, 17>}, {pipeline_mode = #tpu.pipeline_mode<synchronous>, transform_indices = @transform_1, window_bounds = array<i64: 17, 128>}, {transform_indices = @transform_2, window_bounds = array<i64: 8, 128>}]} {
    %c0 = arith.constant 0 : index
    %c0_0 = arith.constant 0 : index
    %0 = vector.load %arg1[%c0, %c0_0] : memref<8x17xf32, #tpu.memory_space<vmem>>, vector<8x17xf32>
    %c0_1 = arith.constant 0 : index
    %c0_2 = arith.constant 0 : index
    %1 = vector.load %arg2[%c0_1, %c0_2] : memref<17x128xf32, #tpu.memory_space<vmem>>, vector<17x128xf32>
    %cst = arith.constant dense<0.000000e+00> : vector<8x128xf32>
    %2 = tpu.matmul %0, %1, %cst {dimension_numbers = #tpu.dot_dimension_numbers<[1], [0], [0], [1], [0, 0, 1, 1], [], []>, precision = #tpu.contract_precision<fp32>} : vector<8x17xf32>, vector<17x128xf32>, vector<8x128xf32> -> vector<8x128xf32>
    %3 = math.sin %2 : vector<8x128xf32>
    %c0_3 = arith.constant 0 : index
    %c0_4 = arith.constant 0 : index
    %4 = vector.load %arg3[%c0_3, %c0_4] : memref<8x128xf32, #tpu.memory_space<vmem>>, vector<8x128xf32>
    tpu.vector_store %arg3[%c0_3, %c0_4], %3 {strides = array<i32>} : memref<8x128xf32, #tpu.memory_space<vmem>>, vector<8x128xf32>,
    return
  }
  func.func @transform_0(%arg0: i32) -> (i32, i32) {
    %c0_i32 = arith.constant 0 : i32
    %c0_i32_0 = arith.constant 0 : i32
    return %arg0, %c0_i32 : i32, i32
  }
  func.func @transform_1(%arg0: i32) -> (i32, i32) {
    %c0_i32 = arith.constant 0 : i32
    %c0_i32_0 = arith.constant 0 : i32
    %c0_i32_1 = arith.constant 0 : i32
    return %c0_i32, %c0_i32_0 : i32, i32
  }
  func.func @transform_2(%arg0: i32) -> (i32, i32) {
    %c0_i32 = arith.constant 0 : i32
    %c0_i32_0 = arith.constant 0 : i32
    return %arg0, %c0_i32 : i32, i32
  }
}

</mosaic_0001>

<llo_original>
// kernel: fourier_layer.1
$region0: #{fourier_layer.1}
  #allocation0 [shape = 'u32[]', space=smem, size = 0x4, offset = 0x4, fixed_abs, tag = 'smem constant byte address 0x4 - core index']
  #allocation1 [shape = 'u32[72,128]{1,0:T(1,128)}', space=vmem, size = 0x9000, scoped, tag = 'internal scratch']
  %s0 = inlined_call_operand.vmem [shape: f32[4,17], index: 0, kind: input, shape index: {}]
  %s1 = inlined_call_operand.vmem [shape: f32[17,128], index: 1, kind: input, shape index: {}]
  %s2 = inlined_call_operand.vmem [shape: f32[4,128], index: 2, kind: output, shape index: {}]
  %s3 = sld [smem:[#allocation0]]
  $region48: #{fourier_layer.1} parent=0
    _
  %s5 = ssub.s32 1, %s3
  %s6 = scalar_select 0, %s5, %s3
  $region1: #{fourier_layer.1} parent=0
    #allocation2 [shape = 'u8[4096]{0}', space=vmem, size = 0x1000, scoped, tag = 'output window, operand 0, single buffered']
    // Predicated region
    $region2: #{fourier_layer.1} parent=1 // pred_check
      _
    $region3: #{fourier_layer.1} parent=1 // pred_check_branch
      %8 = sbr.rel (0) target = $region5
    $region4: #{fourier_layer.1} parent=1 // pred_region
      _
    $region5: #{fourier_layer.1} parent=1 // pred_fallthru
      _
    // Predicated region
    $region6: #{fourier_layer.1} parent=1 // pred_check
      _
    $region7: #{fourier_layer.1} parent=1 // pred_check_branch
      %10 = sbr.rel (0) target = $region9
    $region8: #{fourier_layer.1} parent=1 // pred_region
      _
    $region9: #{fourier_layer.1} parent=1 // pred_fallthru
      _
    %v11 = vld [vmem:[%s0] sm:$0xff]
    %v12 = vld [vmem:[%s1] sm:$0xff]
    %v13 = vld [vmem:[%s1 + $0x8] sm:$0xff]
    %v14 = vld [vmem:[%s1 + $0x10] sm:$0x1]
    %vm15 = vcmask 138240
    %v17 = vsel %vm15, %v11, 0
    %vm19 = vcmask 1040384
    %v21 = vsel %vm19, %v14, 0
    %23 = vmatpush.msra.mxu0 0.0
    %24 = vmatpush.msra.mxu0 0.0
    %25 = vmatpush.msra.mxu0 0.0
    %26 = vmatpush.msra.mxu0 0.0
    %27 = vmatpush.msra.mxu0 0.0
    %28 = vmatpush.msra.mxu0 0.0
    %29 = vmatpush.msra.mxu0 0.0
    %30 = vmatpush.msra.mxu0 0.0
    %31 = vmatpush.msra.mxu0 0.0
    %32 = vmatpush.msra.mxu0 0.0
    %33 = vmatpush.msra.mxu0 0.0
    %34 = vmatpush.msra.mxu0 0.0
    %35 = vmatpush.msra.mxu0 0.0
    %v36 = vand.u32 %v21, 4294901760
    %37 = vmatpush.msra.mxu0 %v36
    %v38 = vand.u32 %v13, 4294901760
    %39 = vmatpush.msra.mxu0 %v38
    %v40 = vand.u32 %v12, 4294901760
    %41 = vmatpush.msra.mxu0 %v40
    %v42 = vand.u32 %v17, 4294901760
    %v43 = vsub.f32 %v17, %v42
    %v44 = vand.u32 %v43, 4294901760
    %v45 = vsub.f32 %v43, %v44
    %v46 = vand.u32 %v45, 4294901760
    %47 = vmatmul.f32.gmra.mxu0 %v46
    %v48 = vpop.f32.mrf.mxu0
    %v49 = vadd.f32 0.0, %v48
    %50 = vdwg.mxu0
    %51 = vmatpush.msra.mxu0 0.0
    %52 = vmatpush.msra.mxu0 0.0
    %53 = vmatpush.msra.mxu0 0.0
    %54 = vmatpush.msra.mxu0 0.0
    %55 = vmatpush.msra.mxu0 0.0
    %56 = vmatpush.msra.mxu0 0.0
    %57 = vmatpush.msra.mxu0 0.0
    %58 = vmatpush.msra.mxu0 0.0
    %59 = vmatpush.msra.mxu0 0.0
    %60 = vmatpush.msra.mxu0 0.0
    %61 = vmatpush.msra.mxu0 0.0
    %62 = vmatpush.msra.mxu0 0.0
    %63 = vmatpush.msra.mxu0 0.0
    %v64 = vand.u32 %v21, 4294901760
    %v65 = vsub.f32 %v21, %v64
    %v66 = vand.u32 %v65, 4294901760
    %v67 = vsub.f32 %v65, %v66
    %v68 = vand.u32 %v67, 4294901760
    %69 = vmatpush.msra.mxu0 %v68
    %v70 = vand.u32 %v13, 4294901760
    %v71 = vsub.f32 %v13, %v70
    %v72 = vand.u32 %v71, 4294901760
    %v73 = vsub.f32 %v71, %v72
    %v74 = vand.u32 %v73, 4294901760
    %75 = vmatpush.msra.mxu0 %v74
    %v76 = vand.u32 %v12, 4294901760
    %v77 = vsub.f32 %v12, %v76
    %v78 = vand.u32 %v77, 4294901760
    %v79 = vsub.f32 %v77, %v78
    %v80 = vand.u32 %v79, 4294901760
    %81 = vmatpush.msra.mxu0 %v80
    %v82 = vand.u32 %v17, 4294901760
    %83 = vmatmul.f32.gmra.mxu0 %v82
    %v84 = vpop.f32.mrf.mxu0
    %v85 = vadd.f32 %v49, %v84
    %86 = vdwg.mxu0
    %87 = vmatpush.msra.mxu0 0.0
    %88 = vmatpush.msra.mxu0 0.0
    %89 = vmatpush.msra.mxu0 0.0
    %90 = vmatpush.msra.mxu0 0.0
    %91 = vmatpush.msra.mxu0 0.0
    %92 = vmatpush.msra.mxu0 0.0
    %93 = vmatpush.msra.mxu0 0.0
    %94 = vmatpush.msra.mxu0 0.0
    %95 = vmatpush.msra.mxu0 0.0
    %96 = vmatpush.msra.mxu0 0.0
    %97 = vmatpush.msra.mxu0 0.0
    %98 = vmatpush.msra.mxu0 0.0
    %99 = vmatpush.msra.mxu0 0.0
    %v100 = vand.u32 %v21, 4294901760
    %v101 = vsub.f32 %v21, %v100
    %102 = vmatpush.msra.mxu0 %v101
    %v103 = vand.u32 %v13, 4294901760
    %v104 = vsub.f32 %v13, %v103
    %105 = vmatpush.msra.mxu0 %v104
    %v106 = vand.u32 %v12, 4294901760
    %v107 = vsub.f32 %v12, %v106
    %108 = vmatpush.msra.mxu0 %v107
    %v109 = vand.u32 %v17, 4294901760
    %v110 = vsub.f32 %v17, %v109
    %111 = vmatmul.f32.gmra.mxu0 %v110
    %v112 = vpop.f32.mrf.mxu0
    %v113 = vadd.f32 %v85, %v112
    %114 = vdwg.mxu0
    %115 = vmatpush.msra.mxu0 0.0
    %116 = vmatpush.msra.mxu0 0.0
    %117 = vmatpush.msra.mxu0 0.0
    %118 = vmatpush.msra.mxu0 0.0
    %119 = vmatpush.msra.mxu0 0.0
    %120 = vmatpush.msra.mxu0 0.0
    %121 = vmatpush.msra.mxu0 0.0
    %122 = vmatpush.msra.mxu0 0.0
    %123 = vmatpush.msra.mxu0 0.0
    %124 = vmatpush.msra.mxu0 0.0
    %125 = vmatpush.msra.mxu0 0.0
    %126 = vmatpush.msra.mxu0 0.0
    %127 = vmatpush.msra.mxu0 0.0
    %v128 = vand.u32 %v21, 4294901760
    %129 = vmatpush.msra.mxu0 %v128
    %v130 = vand.u32 %v13, 4294901760
    %131 = vmatpush.msra.mxu0 %v130
    %v132 = vand.u32 %v12, 4294901760
    %133 = vmatpush.msra.mxu0 %v132
    %v134 = vand.u32 %v17, 4294901760
    %v135 = vsub.f32 %v17, %v134
    %v136 = vand.u32 %v135, 4294901760
    %137 = vmatmul.f32.gmra.mxu0 %v136
    %v138 = vpop.f32.mrf.mxu0
    %v139 = vadd.f32 %v113, %v138
    %140 = vdwg.mxu0
    %141 = vmatpush.msra.mxu0 0.0
    %142 = vmatpush.msra.mxu0 0.0
    %143 = vmatpush.msra.mxu0 0.0
    %144 = vmatpush.msra.mxu0 0.0
    %145 = vmatpush.msra.mxu0 0.0
    %146 = vmatpush.msra.mxu0 0.0
    %147 = vmatpush.msra.mxu0 0.0
    %148 = vmatpush.msra.mxu0 0.0
    %149 = vmatpush.msra.mxu0 0.0
    %150 = vmatpush.msra.mxu0 0.0
    %151 = vmatpush.msra.mxu0 0.0
    %152 = vmatpush.msra.mxu0 0.0
    %153 = vmatpush.msra.mxu0 0.0
    %v154 = vand.u32 %v21, 4294901760
    %v155 = vsub.f32 %v21, %v154
    %v156 = vand.u32 %v155, 4294901760
    %157 = vmatpush.msra.mxu0 %v156
    %v158 = vand.u32 %v13, 4294901760
    %v159 = vsub.f32 %v13, %v158
    %v160 = vand.u32 %v159, 4294901760
    %161 = vmatpush.msra.mxu0 %v160
    %v162 = vand.u32 %v12, 4294901760
    %v163 = vsub.f32 %v12, %v162
    %v164 = vand.u32 %v163, 4294901760
    %165 = vmatpush.msra.mxu0 %v164
    %v166 = vand.u32 %v17, 4294901760
    %167 = vmatmul.f32.gmra.mxu0 %v166
    %v168 = vpop.f32.mrf.mxu0
    %v169 = vadd.f32 %v139, %v168
    %170 = vdwg.mxu0
    %171 = vmatpush.msra.mxu0 0.0
    %172 = vmatpush.msra.mxu0 0.0
    %173 = vmatpush.msra.mxu0 0.0
    %174 = vmatpush.msra.mxu0 0.0
    %175 = vmatpush.msra.mxu0 0.0
    %176 = vmatpush.msra.mxu0 0.0
    %177 = vmatpush.msra.mxu0 0.0
    %178 = vmatpush.msra.mxu0 0.0
    %179 = vmatpush.msra.mxu0 0.0
    %180 = vmatpush.msra.mxu0 0.0
    %181 = vmatpush.msra.mxu0 0.0
    %182 = vmatpush.msra.mxu0 0.0
    %183 = vmatpush.msra.mxu0 0.0
    %v184 = vand.u32 %v21, 4294901760
    %185 = vmatpush.msra.mxu0 %v184
    %v186 = vand.u32 %v13, 4294901760
    %187 = vmatpush.msra.mxu0 %v186
    %v188 = vand.u32 %v12, 4294901760
    %189 = vmatpush.msra.mxu0 %v188
    %v190 = vand.u32 %v17, 4294901760
    %191 = vmatmul.f32.gmra.mxu0 %v190
    %v192 = vpop.f32.mrf.mxu0
    %v193 = vadd.f32 %v169, %v192
    %194 = vdwg.mxu0
    %v195 = vand.u32 2147483647, %v193
    %vm196 = vcmp.le.f32.partialorder %v195, 0.7853982
    %vm197 = vcmp.lt.s32.totalorder %v193, 0
    %v198 = vand.u32 %v193, 2139095040
    %v199 = vshrl.u32 %v198, 23
    %v200 = vsub.s32 %v199, 127
    %v201 = vand.u32 2147483647, %v193
    %v202 = vand.u32 %v201, 8388607
    %v203 = vor.u32 %v202, 8388608
    %v204 = vsub.s32 0, %v203
    %v205 = vadd.s32 %v200, 1
    %vm206 = vcmp.gt.s32.totalorder %v205, 0
    %v207 = vsel %vm206, %v205, 0
    %v208 = vshrl.u32 %v207, 5
    %v209 = vand.u32 %v207, 31
    %v210 = vsub.s32 32, %v209
    %v211 = vshrl.u32 683565275, %v210
    %v212 = vshll.u32 683565275, %v209
    %v213 = vshrl.u32 2475754826, %v210
    %v214 = vor.u32 %v212, %v213
    %v215 = vshll.u32 2475754826, %v209
    %v216 = vshrl.u32 2131351028, %v210
    %v217 = vor.u32 %v215, %v216
    %v218 = vshll.u32 2131351028, %v209
    %v219 = vshrl.u32 2102212464, %v210
    %v220 = vor.u32 %v218, %v219
    %v221 = vshll.u32 2102212464, %v209
    %v222 = vshrl.u32 920167782, %v210
    %v223 = vor.u32 %v221, %v222
    %v224 = vshll.u32 920167782, %v209
    %v225 = vshrl.u32 1326507024, %v210
    %v226 = vor.u32 %v224, %v225
    %vm227 = vcmp.lt.s32.totalorder %v208, 1
    %vm228 = vcmp.lt.s32.totalorder %v208, 2
    %vm229 = vcmp.lt.s32.totalorder %v208, 3
    %vm230 = vcmp.lt.s32.totalorder %v208, 4
    %v231 = vsel %vm227, %v211, %v214
    %v232 = vsel %vm230, %v220, 2102212464
    %v233 = vsel %vm229, %v217, %v232
    %v234 = vsel %vm228, %v231, %v233
    %v235 = vsel %vm227, %v214, %v217
    %v236 = vsel %vm230, %v223, 920167782
    %v237 = vsel %vm229, %v220, %v236
    %v238 = vsel %vm228, %v235, %v237
    %v239 = vsel %vm227, %v217, %v220
    %v240 = vsel %vm230, %v226, 1326507024
    %v241 = vsel %vm229, %v223, %v240
    %v242 = vsel %vm228, %v239, %v241
    %v243 = vshll.u32 %v203, 8
    %v244 = vand.u32 %v243, 65535
    %v245 = vshrl.u32 %v243, 16
    %v246 = vand.u32 %v242, 65535
    %v247 = vshrl.u32 %v242, 16
    %v248 = vmul.u32 %v244, %v246
    %v249 = vmul.u32 %v244, %v247
    %v250 = vmul.u32 %v245, %v246
    %v251 = vmul.u32 %v245, %v247
    %v252 = vshll.u32 %v249, 16
    %v253 = vshrl.u32 %v249, 16
    %v254 = vshll.u32 %v250, 16
    %v255 = vshrl.u32 %v250, 16
    %vm256 = vc.u32 %v248, %v252
    %v257 = vsel %vm256, 1, 0
    %v258 = vadd.s32 %v248, %v252
    %v259 = vadd.s32 %v251, %v257
    %vm260 = vc.u32 %v258, %v254
    %v261 = vsel %vm260, 1, 0
    %v262 = vadd.s32 %v258, %v254
    %v263 = vadd.s32 %v259, %v261
    %v264 = vadd.s32 %v263, %v253
    %v265 = vadd.s32 %v264, %v255
    %v266 = vand.u32 %v243, 65535
    %v267 = vshrl.u32 %v243, 16
    %v268 = vand.u32 %v238, 65535
    %v269 = vshrl.u32 %v238, 16
    %v270 = vmul.u32 %v266, %v268
    %v271 = vmul.u32 %v266, %v269
    %v272 = vmul.u32 %v267, %v268
    %v273 = vmul.u32 %v267, %v269
    %v274 = vshll.u32 %v271, 16
    %v275 = vshrl.u32 %v271, 16
    %v276 = vshll.u32 %v272, 16
    %v277 = vshrl.u32 %v272, 16
    %vm278 = vc.u32 %v270, %v274
    %v279 = vsel %vm278, 1, 0
    %v280 = vadd.s32 %v270, %v274
    %v281 = vadd.s32 %v273, %v279
    %vm282 = vc.u32 %v280, %v276
    %v283 = vsel %vm282, 1, 0
    %v284 = vadd.s32 %v280, %v276
    %v285 = vadd.s32 %v281, %v283
    %v286 = vadd.s32 %v285, %v275
    %v287 = vadd.s32 %v286, %v277
    %v288 = vmul.u32 %v243, %v234
    %v289 = vadd.s32 %v265, %v284
    %vm290 = vc.u32 %v265, %v284
    %v291 = vadd.s32 %v287, 1
    %v292 = vsel %vm290, %v291, %v287
    %v293 = vadd.s32 %v288, %v292
    %v294 = vadd.s32 %v293, 536870912
    %v295 = vshrl.u32 %v294, 30
    %v296 = vshll.u32 %v295, 30
    %v297 = vsub.s32 %v293, %v296
    %vm298 = vcmp.lt.s32.totalorder %v297, 0
    %v299 = vsub.s32 0, %v297
    %v300 = vsel %vm298, %v299, %v297
    %v301 = vclz %v300
    %v302 = vsub.s32 %v301, 2
    %vm303 = vcmp.gt.s32.totalorder 0, %v302
    %v304 = vsel %vm303, 0, %v302
    %v305 = vsub.s32 32, %v304
    %v306 = vshll.u32 %v297, %v304
    %v307 = vshrl.u32 %v289, %v305
    %v308 = vor.u32 %v306, %v307
    %v309 = vsub.s32 4294967266, %v304
    %v310 = vadd.s32 %v309, 127
    %v311 = vshll.u32 %v310, 23
    %v312 = vor.u32 4788187, %v311
    %v313 = vand.u32 2147483647, %v312
    %v315 = vcvt.s32.f32 %v308
    %v316 = vmul.f32 %v315, %v313
    %v317 = vxor.u32 %v316, 2147483648
    %v318 = vsel %vm197, %v317, %v316
    %v319 = vsub.s32 4, %v295
    %v320 = vsel %vm197, %v319, %v295
    %v321 = vsel %vm196, %v193, %v318
    %v322 = vsel %vm196, 0, %v320
    %v323 = vmul.f32 %v321, %v321
    %v324 = vmul.f32 %v323, -0.001358992
    %v325 = vadd.f32 %v324, 0.041655596
    %v326 = vmul.f32 %v323, %v325
    %v327 = vadd.f32 %v326, -0.4999988
    %v328 = vmul.f32 %v323, %v327
    %v329 = vadd.f32 1.0, %v328
    %v330 = vmul.f32 %v321, %v321
    %v331 = vmul.f32 %v330, -0.00019511016
    %v332 = vadd.f32 %v331, 0.008332121
    %v333 = vmul.f32 %v330, %v332
    %v334 = vadd.f32 %v333, -0.16666654
    %v335 = vmul.f32 %v330, %v334
    %v336 = vadd.f32 %v335, 1.0
    %v337 = vmul.f32 %v336, %v321
    %vm338 = vweird.f32 %v193
    %v339 = vadd.s32 %v322, 3
    %v340 = vand.u32 %v339, 3
    %vm341 = vcmp.lt.s32.totalorder %v340, 2
    %vm342 = vcmp.eq.s32.totalorder %v340, 0
    %v343 = vxor.u32 %v337, 2147483648
    %v344 = vsel %vm342, %v329, %v343
    %vm345 = vcmp.eq.s32.totalorder %v340, 2
    %v346 = vxor.u32 %v329, 2147483648
    %v347 = vsel %vm345, %v346, %v337
    %v348 = vsel %vm341, %v344, %v347
    %v349 = vsel %vm338, nan, %v348
    %350 = vst [vmem:[#allocation2] sm:$0xff] %v349
    // Predicated region
    $region10: #{fourier_layer.1} parent=1 // pred_check
      _
    $region11: #{fourier_layer.1} parent=1 // pred_check_branch
      %352 = sbr.rel (0) target = $region13
    $region12: #{fourier_layer.1} parent=1 // pred_region
      // Predicated region
      $region14: #{fourier_layer.1} parent=12 // pred_check
        _
      $region15: #{fourier_layer.1} parent=12 // pred_check_branch
        %354 = sbr.rel (0) target = $region17
      $region16: #{fourier_layer.1} parent=12 // pred_region
        // Predicated region
        $region18: #{fourier_layer.1} parent=16 // pred_check
          _
        $region19: #{fourier_layer.1} parent=16 // pred_check_branch
          %356 = sbr.rel target = $region21
        $region20: #{fourier_layer.1} parent=16 // pred_region
          // Predicated region
          $region33: #{fourier_layer.1} parent=20 // pred_check
            _
          $region34: #{fourier_layer.1} parent=20 // pred_check_branch
            %372 = sbr.rel (0) target = $region36
          $region35: #{fourier_layer.1} parent=20 // pred_region
            %s374 = ssub.s32 16, 1
            loop: start=0, step=1, limit=1
            $region37: #{fourier_layer.1} parent=35 // loop_pre_header
              _
            $region38: #{fourier_layer.1} parent=35 // loop_header
              %s376 = sphi 0, %s380
              %p377 = scmp.ge.s32.totalorder %s376, 1
              %s381 = sphi [#allocation2], [#allocation2]
              %s382 = sphi %s2, %s2
            $region39: #{fourier_layer.1} parent=35 // loop_header_branch
              %379 = sbr.rel (%p377) target = $region43
            $region40: #{fourier_layer.1} parent=35 // loop_body
              %v383 = vld [vmem:[%s381] sm:%s374]
              %384 = vst [vmem:[%s382] sm:%s374] %v383
            $region41: #{fourier_layer.1} parent=35 // loop_footer
              %s380 = sadd.s32 1, %s376
            $region42: #{fourier_layer.1} parent=35 // loop_footer_branch
              %375 = sbr.rel target = $region38
            $region43: #{fourier_layer.1} parent=35 // loop_exit
              _
          $region36: #{fourier_layer.1} parent=20 // pred_fallthru
            _
        $region21: #{fourier_layer.1} parent=16 // pred_fallthru
          _
        // Predicated region
        $region22: #{fourier_layer.1} parent=16 // pred_check
          _
        $region23: #{fourier_layer.1} parent=16 // pred_check_branch
          %358 = sbr.rel (0) target = $region25
        $region24: #{fourier_layer.1} parent=16 // pred_region
          %s360 = ssub.s32 16, 1
          loop: start=0, step=1, limit=1
          $region26: #{fourier_layer.1} parent=24 // loop_pre_header
            _
          $region27: #{fourier_layer.1} parent=24 // loop_header
            %s362 = sphi 0, %s366
            %p363 = scmp.ge.s32.totalorder %s362, 1
            %s367 = sphi [#allocation2], [#allocation2]
            %s368 = sphi %s2, %s2
          $region28: #{fourier_layer.1} parent=24 // loop_header_branch
            %365 = sbr.rel (%p363) target = $region32
          $region29: #{fourier_layer.1} parent=24 // loop_body
            %v369 = vld [vmem:[%s367] sm:%s360]
            %370 = vst [vmem:[%s368] sm:%s360] %v369
          $region30: #{fourier_layer.1} parent=24 // loop_footer
            %s366 = sadd.s32 1, %s362
          $region31: #{fourier_layer.1} parent=24 // loop_footer_branch
            %361 = sbr.rel target = $region27
          $region32: #{fourier_layer.1} parent=24 // loop_exit
            _
        $region25: #{fourier_layer.1} parent=16 // pred_fallthru
          _
      $region17: #{fourier_layer.1} parent=12 // pred_fallthru
        _
      %385 = vnop
    $region13: #{fourier_layer.1} parent=1 // pred_fallthru
      _
    // Predicated region
    $region44: #{fourier_layer.1} parent=1 // pred_check
      _
    $region45: #{fourier_layer.1} parent=1 // pred_check_branch
      %387 = sbr.rel (0) target = $region47
    $region46: #{fourier_layer.1} parent=1 // pred_region
      _
    $region47: #{fourier_layer.1} parent=1 // pred_fallthru
      _

</llo_original>
